<compile_context>
chip_gen: v5e
topology: v5e:2x2
jax: 0.10.0
libtpu: 0.0.40
codegen_flags: <defaults>
</compile_context>

<pallas_src>
import functools

import jax
import jax.numpy as jnp
from jax import lax
from jax.experimental import pallas as pl
from jax.experimental.pallas import tpu as pltpu


def _leaky_relu(x, slope=0.01):
    return jnp.where(x > 0, x, slope * x)


def _round_up(x, m):
    return (x + m - 1) // m * m


def agt_layer_kernel(h_ref, wr_ref, ar_ref, hb_ref, wf_ref, g_ref, b_ref, o_ref,
                     *, temper, n_valid, d_valid, ln_eps=1e-5):
    bt, n_pad, d_pad = h_ref.shape                    # (block_b, Np, Dp)
    nheads = ar_ref.shape[1]
    inv_t = 1.0 / float(temper)
    mxu_dtype = h_ref.dtype

    h_blk = h_ref[...]                                # (bt, Np, Dp), native dtype
    h2 = h_blk.reshape(bt * n_pad, d_pad)             # tile-aligned merge -> free

    # ---- fused right-projection over all bt*Np rows (one big MXU matmul) ----
    fr2 = jnp.dot(h2, wr_ref[...], preferred_element_type=jnp.float32)      # (bt*Np, Dp) f32

    # ---- per-head logits: sr[(b,j), h] = att_r . leaky(fr[(b,j), head-h cols]) ----
    sr2 = jnp.dot(_leaky_relu(fr2).astype(mxu_dtype), ar_ref[...],
                  preferred_element_type=jnp.float32)                        # (bt*Np, H) f32
    sr = sr2.reshape(bt, n_pad, nheads)

    # ---- softmax over the node axis j (row-constant sl term cancels) ----
    logits = sr * inv_t
    if n_pad != n_valid:                              # zero-padded rows out of the softmax
        row_ids = lax.broadcasted_iota(jnp.int32, (1, n_pad, 1), 1)
        logits = jnp.where(row_ids < n_valid, logits, -1e30)
    m = jnp.max(logits, axis=1, keepdims=True)        # (bt, 1, H)
    e = jnp.exp(logits - m)
    w = e / jnp.sum(e, axis=1, keepdims=True)         # (bt, Np, H) f32

    # ---- context: broadcast head weights to their D columns (lane-dense MXU matmul),
    #      then contract over the node axis: ctx[b,d] = sum_j w[b,j,head(d)] * fr[b,j,d] ----
    w_full2 = jnp.dot(w.reshape(bt * n_pad, nheads).astype(mxu_dtype), hb_ref[...],
                      preferred_element_type=jnp.float32)                    # (bt*Np, Dp) f32
    fr = fr2.reshape(bt, n_pad, d_pad)
    ctx = jnp.sum(w_full2.reshape(bt, n_pad, d_pad) * fr, axis=1)            # (bt, Dp) f32

    # ---- final projection (one small MXU matmul for the whole block) ----
    fh = jnp.dot(ctx.astype(mxu_dtype), wf_ref[...],
                 preferred_element_type=jnp.float32)                         # (bt, Dp) f32

    # ---- residual + LayerNorm over the whole block, single lane-dense store ----
    x = h_blk.astype(jnp.float32) + fh[:, None, :]                           # (bt, Np, Dp)
    mean = jnp.sum(x, axis=-1, keepdims=True) * (1.0 / d_valid)              # pads are exact 0
    xc = x - mean
    if d_pad != d_valid:                              # padded lanes must not feed the variance
        lane_ids = lax.broadcasted_iota(jnp.int32, (1, 1, d_pad), 2)
        sq = jnp.where(lane_ids < d_valid, xc * xc, 0.0)
    else:
        sq = xc * xc
    var = jnp.sum(sq, axis=-1, keepdims=True) * (1.0 / d_valid)
    xhat = xc * lax.rsqrt(var + ln_eps)
    o_ref[...] = (xhat * g_ref[...].astype(jnp.float32)
                  + b_ref[...].astype(jnp.float32)).astype(o_ref.dtype)


def agt_layer(h, params, *, nheads=2, temper=1.0, block_b=None):
    """AGTLayer.forward(h, rh=None) in eval mode.

    params = (W_l^T, W_r^T, att_l^T, att_r^T, W_final^T, LN_gamma, LN_beta),
    linear weights pre-transposed to (in, out).
    """
    wl, wr, al, ar, wf, gamma, beta = params
    B, N, D = h.shape
    head_dim = D // nheads
    # W_l / att_l cannot affect the output when rh is None (their contribution is constant
    # along the softmax axis and cancels); accepted for API compatibility only.
    del wl, al

    dtype = h.dtype
    itemsize = jnp.dtype(dtype).itemsize
    sub = {4: 8, 2: 16, 1: 32}.get(itemsize, 8)       # sublane tile for this dtype
    n_pad = _round_up(N, sub)
    d_pad = _round_up(D, 128)                         # lane-dense D

    # Pack att_r into a block-structured (D, nheads) matrix; (nheads, D) head->cols 0/1 matrix.
    ar_flat = jnp.asarray(ar, jnp.float32).reshape(-1)                       # (head_dim,)
    eye_h = jnp.eye(nheads, dtype=jnp.float32)
    ar_packed = jnp.kron(eye_h, ar_flat[:, None])                            # (D, nheads)
    head_bcast = jnp.kron(eye_h, jnp.ones((1, head_dim), jnp.float32))       # (nheads, D)

    # Zero-pad to aligned shapes (padded columns stay exactly 0 through every matmul; padded
    # rows are masked out of the softmax inside the kernel).  MXU operands in the input dtype.
    h_p = jnp.pad(h, ((0, 0), (0, n_pad - N), (0, d_pad - D)))
    wr_p = jnp.pad(jnp.asarray(wr, jnp.float32), ((0, d_pad - D), (0, d_pad - D))).astype(dtype)
    wf_p = jnp.pad(jnp.asarray(wf, jnp.float32), ((0, d_pad - D), (0, d_pad - D))).astype(dtype)
    ar_p = jnp.pad(ar_packed, ((0, d_pad - D), (0, 0))).astype(dtype)
    hb_p = jnp.pad(head_bcast, ((0, 0), (0, d_pad - D))).astype(dtype)
    g_p = jnp.pad(jnp.asarray(gamma, jnp.float32).reshape(1, D), ((0, 0), (0, d_pad - D)))
    b_p = jnp.pad(jnp.asarray(beta, jnp.float32).reshape(1, D), ((0, 0), (0, d_pad - D)))

    # Per-generation VMEM budget (v7x: 64 MiB physical per TensorCore -> conservative 44 MiB).
    kind = ""
    try:
        kind = jax.devices()[0].device_kind.lower()
    except Exception:
        pass
    older = any(v in kind for v in ("v2", "v3", "v4", "v5", "v6"))
    vmem_budget = (96 if older else 44) * 1024 * 1024

    if block_b is None:
        # bytes per grid step: double-buffered h & out blocks + ~5 f32-sized live intermediates
        per_b = n_pad * d_pad * (4 * itemsize + 5 * 4)
        weight_bytes = (2 * (2 * d_pad * d_pad + 2 * nheads * d_pad) * itemsize
                        + 2 * 2 * d_pad * 4)
        fit = max(1, (vmem_budget - weight_bytes) // per_b)
        target = max(1, 512 // n_pad)                 # aim for >= ~512 MXU rows per step
        block_b = int(min(B, fit, target))
    block_b = max(1, min(block_b, B))
    if B >= 2:
        block_b = max(1, min(block_b, B // 2))        # >= 2 grid steps (both v7x TCs busy)
    while B % block_b:
        block_b -= 1
    grid = (B // block_b,)

    rows = B * n_pad
    flops = 2 * rows * d_pad * d_pad + 4 * rows * d_pad * nheads + 2 * B * d_pad * d_pad
    bytes_accessed = (2 * B * n_pad * d_pad + 2 * d_pad * d_pad
                      + 2 * nheads * d_pad) * itemsize + 2 * d_pad * 4
    cost = pl.CostEstimate(flops=int(flops), transcendentals=int(rows * nheads),
                           bytes_accessed=int(bytes_accessed))

    kernel = functools.partial(agt_layer_kernel, temper=float(temper),
                               n_valid=N, d_valid=D)
    rep = lambda b: (0, 0)

    out = pl.pallas_call(
        kernel,
        out_shape=jax.ShapeDtypeStruct((B, n_pad, d_pad), dtype),
        grid_spec=pltpu.PrefetchScalarGridSpec(
            num_scalar_prefetch=0,
            grid=grid,
            in_specs=[
                pl.BlockSpec((block_b, n_pad, d_pad), lambda b: (b, 0, 0)),  # h
                pl.BlockSpec((d_pad, d_pad), rep),                           # W_r^T
                pl.BlockSpec((d_pad, nheads), rep),                          # packed att_r
                pl.BlockSpec((nheads, d_pad), rep),                          # head -> columns
                pl.BlockSpec((d_pad, d_pad), rep),                           # W_final^T
                pl.BlockSpec((1, d_pad), rep),                               # LN gamma
                pl.BlockSpec((1, d_pad), rep),                               # LN beta
            ],
            out_specs=pl.BlockSpec((block_b, n_pad, d_pad), lambda b: (b, 0, 0)),
        ),
        compiler_params=pltpu.CompilerParams(
            dimension_semantics=("parallel",),
            vmem_limit_bytes=int(vmem_budget)),
        cost_estimate=cost,
    )(h_p, wr_p, ar_p, hb_p, wf_p, g_p, b_p)

    return out[:, :N, :D]


def agt_layer_ref(h, params, *, nheads=2, temper=1.0):
    """Pure-JAX reference mirroring the full PyTorch forward (eval mode, rh=None)."""
    wl, wr, al, ar, wf, gamma, beta = params
    B, N, D = h.shape
    hd = D // nheads
    fl = (h @ wl).reshape(B, N, nheads, hd).transpose(0, 2, 1, 3)   # (B,H,N,hd)
    fr = (h @ wr).reshape(B, N, nheads, hd).transpose(0, 2, 1, 3)
    sl = _leaky_relu(fl) @ al                                       # (B,H,N,1)
    sr = _leaky_relu(fr) @ ar                                       # (B,H,N,1)
    score = (sl + jnp.swapaxes(sr, -1, -2)) / temper                # (B,H,N,N)
    attn = jax.nn.softmax(score, axis=-1)
    ctx = attn @ fr                                                 # (B,H,N,hd)
    h_sa = ctx.transpose(0, 2, 1, 3).reshape(B, N, D)
    fh = h_sa @ wf
    x = h + fh
    mean = jnp.mean(x, axis=-1, keepdims=True)
    var = jnp.mean((x - mean) ** 2, axis=-1, keepdims=True)
    xhat = (x - mean) / jnp.sqrt(var + 1e-5)
    return xhat * gamma + beta


if __name__ == "__main__":
    B, N, D = 2, 8, 32
    nheads = 2
    hd = D // nheads

    key = jax.random.PRNGKey(0)
    k_h, k_wl, k_wr, k_al, k_ar, k_wf = jax.random.split(key, 6)

    h = jax.random.normal(k_h, (B, N, D), dtype=jnp.float32)
    # nn.Linear(D, D, bias=False) weight is (out, in); we pass the transpose (in, out).
    wl = jax.random.normal(k_wl, (D, D), dtype=jnp.float32) * 0.1
    wr = jax.random.normal(k_wr, (D, D), dtype=jnp.float32) * 0.1
    al = jax.random.normal(k_al, (hd, 1), dtype=jnp.float32) * 0.1   # att_l weight^T
    ar = jax.random.normal(k_ar, (hd, 1), dtype=jnp.float32) * 0.1   # att_r weight^T
    wf = jax.random.normal(k_wf, (D, D), dtype=jnp.float32) * 0.1
    gamma = jnp.ones((1, D), dtype=jnp.float32)                      # LayerNorm weight
    beta = jnp.zeros((1, D), dtype=jnp.float32)                      # LayerNorm bias

    params = (wl, wr, al, ar, wf, gamma, beta)

    out = agt_layer(h, params, nheads=nheads, temper=1.0)
    out = jax.block_until_ready(out)

    ref = agt_layer_ref(h, params, nheads=nheads, temper=1.0)
    assert out.shape == ref.shape, "shape mismatch vs reference"
    assert jnp.allclose(out, ref, atol=1e-4, rtol=1e-4), "mismatch vs reference"

    print("KERNEL_OK")
</pallas_src>

<mosaic_0001>
module attributes {stable_mosaic.version = 11 : i64} {
  func.func @agt_layer_kernel(%arg0: i32, %arg1: memref<1x8x128xf32, #tpu.memory_space<vmem>>, %arg2: memref<128x128xf32, #tpu.memory_space<vmem>>, %arg3: memref<128x2xf32, #tpu.memory_space<vmem>>, %arg4: memref<2x128xf32, #tpu.memory_space<vmem>>, %arg5: memref<128x128xf32, #tpu.memory_space<vmem>>, %arg6: memref<1x128xf32, #tpu.memory_space<vmem>>, %arg7: memref<1x128xf32, #tpu.memory_space<vmem>>, %arg8: memref<1x8x128xf32, #tpu.memory_space<vmem>>) attributes {dimension_semantics = [#tpu.dimension_semantics<parallel>], iteration_bounds = array<i64: 2>, scalar_prefetch = 0 : i64, scratch_operands = 0 : i64, tpu.core_type = #tpu.core_type<tc>, window_params = [{transform_indices = @transform_0, window_bounds = array<i64: 1, 8, 128>}, {pipeline_mode = #tpu.pipeline_mode<synchronous>, transform_indices = @transform_1, window_bounds = array<i64: 128, 128>}, {pipeline_mode = #tpu.pipeline_mode<synchronous>, transform_indices = @transform_2, window_bounds = array<i64: 128, 2>}, {pipeline_mode = #tpu.pipeline_mode<synchronous>, transform_indices = @transform_3, window_bounds = array<i64: 2, 128>}, {pipeline_mode = #tpu.pipeline_mode<synchronous>, transform_indices = @transform_4, window_bounds = array<i64: 128, 128>}, {pipeline_mode = #tpu.pipeline_mode<synchronous>, transform_indices = @transform_5, window_bounds = array<i64: 1, 128>}, {pipeline_mode = #tpu.pipeline_mode<synchronous>, transform_indices = @transform_6, window_bounds = array<i64: 1, 128>}, {transform_indices = @transform_7, window_bounds = array<i64: 1, 8, 128>}]} {
    %c0 = arith.constant 0 : index
    %c0_0 = arith.constant 0 : index
    %c0_1 = arith.constant 0 : index
    %0 = vector.load %arg1[%c0, %c0_0, %c0_1] : memref<1x8x128xf32, #tpu.memory_space<vmem>>, vector<1x8x128xf32>
    %1 = vector.shape_cast %0 : vector<1x8x128xf32> to vector<8x128xf32>
    %c0_2 = arith.constant 0 : index
    %c0_3 = arith.constant 0 : index
    %2 = vector.load %arg2[%c0_2, %c0_3] : memref<128x128xf32, #tpu.memory_space<vmem>>, vector<128x128xf32>
    %cst = arith.constant dense<0.000000e+00> : vector<8x128xf32>
    %3 = tpu.matmul %1, %2, %cst {dimension_numbers = #tpu.dot_dimension_numbers<[1], [0], [0], [1], [0, 0, 1, 1], [], []>} : vector<8x128xf32>, vector<128x128xf32>, vector<8x128xf32> -> vector<8x128xf32>
    %cst_4 = arith.constant 0.000000e+00 : f32
    %4 = vector.broadcast %cst_4 : f32 to vector<8x128xf32>
    %5 = arith.cmpf ogt, %3, %4 : vector<8x128xf32>
    %cst_5 = arith.constant 0.00999999977 : f32
    %6 = vector.broadcast %cst_5 : f32 to vector<8x128xf32>
    %7 = arith.mulf %6, %3 : vector<8x128xf32>
    %8 = arith.select %5, %3, %7 : vector<8x128xi1>, vector<8x128xf32>
    %c0_6 = arith.constant 0 : index
    %c0_7 = arith.constant 0 : index
    %9 = vector.load %arg3[%c0_6, %c0_7] : memref<128x2xf32, #tpu.memory_space<vmem>>, vector<128x2xf32>
    %cst_8 = arith.constant dense<0.000000e+00> : vector<8x2xf32>
    %10 = tpu.matmul %8, %9, %cst_8 {dimension_numbers = #tpu.dot_dimension_numbers<[1], [0], [0], [1], [0, 0, 1, 1], [], []>} : vector<8x128xf32>, vector<128x2xf32>, vector<8x2xf32> -> vector<8x2xf32>
    %11 = vector.shape_cast %10 : vector<8x2xf32> to vector<1x8x2xf32>
    %cst_9 = arith.constant 1.000000e+00 : f32
    %12 = vector.broadcast %cst_9 : f32 to vector<1x8x2xf32>
    %13 = arith.mulf %11, %12 : vector<1x8x2xf32>
    %cst_10 = arith.constant dense<0xFF800000> : vector<1x2xf32>
    %14 = vector.multi_reduction <maximumf>, %13, %cst_10 [1] : vector<1x8x2xf32> to vector<1x2xf32>
    %15 = vector.shape_cast %14 : vector<1x2xf32> to vector<1x1x2xf32>
    %16 = vector.broadcast %15 : vector<1x1x2xf32> to vector<1x8x2xf32>
    %17 = arith.subf %13, %16 : vector<1x8x2xf32>
    %18 = math.exp %17 : vector<1x8x2xf32>
    %cst_11 = arith.constant dense<0.000000e+00> : vector<1x2xf32>
    %19 = vector.multi_reduction <add>, %18, %cst_11 [1] : vector<1x8x2xf32> to vector<1x2xf32>
    %20 = vector.shape_cast %19 : vector<1x2xf32> to vector<1x1x2xf32>
    %21 = vector.broadcast %20 : vector<1x1x2xf32> to vector<1x8x2xf32>
    %22 = arith.divf %18, %21 : vector<1x8x2xf32>
    %23 = vector.shape_cast %22 : vector<1x8x2xf32> to vector<8x2xf32>
    %c0_12 = arith.constant 0 : index
    %c0_13 = arith.constant 0 : index
    %24 = vector.load %arg4[%c0_12, %c0_13] : memref<2x128xf32, #tpu.memory_space<vmem>>, vector<2x128xf32>
    %cst_14 = arith.constant dense<0.000000e+00> : vector<8x128xf32>
    %25 = tpu.matmul %23, %24, %cst_14 {dimension_numbers = #tpu.dot_dimension_numbers<[1], [0], [0], [1], [0, 0, 1, 1], [], []>} : vector<8x2xf32>, vector<2x128xf32>, vector<8x128xf32> -> vector<8x128xf32>
    %26 = vector.shape_cast %3 : vector<8x128xf32> to vector<1x8x128xf32>
    %27 = vector.shape_cast %25 : vector<8x128xf32> to vector<1x8x128xf32>
    %28 = arith.mulf %27, %26 : vector<1x8x128xf32>
    %cst_15 = arith.constant dense<0.000000e+00> : vector<1x128xf32>
    %29 = vector.multi_reduction <add>, %28, %cst_15 [1] : vector<1x8x128xf32> to vector<1x128xf32>
    %c0_16 = arith.constant 0 : index
    %c0_17 = arith.constant 0 : index
    %30 = vector.load %arg5[%c0_16, %c0_17] : memref<128x128xf32, #tpu.memory_space<vmem>>, vector<128x128xf32>
    %cst_18 = arith.constant dense<0.000000e+00> : vector<1x128xf32>
    %31 = tpu.matmul %29, %30, %cst_18 {dimension_numbers = #tpu.dot_dimension_numbers<[1], [0], [0], [1], [0, 0, 1, 1], [], []>} : vector<1x128xf32>, vector<128x128xf32>, vector<1x128xf32> -> vector<1x128xf32>
    %32 = vector.shape_cast %31 : vector<1x128xf32> to vector<1x1x128xf32>
    %33 = vector.broadcast %32 : vector<1x1x128xf32> to vector<1x8x128xf32>
    %34 = arith.addf %0, %33 : vector<1x8x128xf32>
    %cst_19 = arith.constant dense<0.000000e+00> : vector<1x8xf32>
    %35 = vector.multi_reduction <add>, %34, %cst_19 [2] : vector<1x8x128xf32> to vector<1x8xf32>
    %36 = vector.shape_cast %35 : vector<1x8xf32> to vector<1x8x1xf32>
    %cst_20 = arith.constant 3.125000e-02 : f32
    %37 = vector.broadcast %cst_20 : f32 to vector<1x8x1xf32>
    %38 = arith.mulf %36, %37 : vector<1x8x1xf32>
    %39 = vector.broadcast %38 : vector<1x8x1xf32> to vector<1x8x128xf32>
    %40 = arith.subf %34, %39 : vector<1x8x128xf32>
    %41 = tpu.iota {dimensions = array<i32: 2>} : vector<1x1x128xi32>
    %c32_i32 = arith.constant 32 : i32
    %42 = vector.broadcast %c32_i32 : i32 to vector<1x1x128xi32>
    %43 = arith.cmpi slt, %41, %42 : vector<1x1x128xi32>
    %44 = arith.mulf %40, %40 : vector<1x8x128xf32>
    %cst_21 = arith.constant 0.000000e+00 : f32
    %45 = vector.shape_cast %43 : vector<1x1x128xi1> to vector<1x1x128xi1>
    %46 = vector.broadcast %45 : vector<1x1x128xi1> to vector<1x8x128xi1>
    %47 = vector.broadcast %cst_21 : f32 to vector<1x8x128xf32>
    %48 = arith.select %46, %44, %47 : vector<1x8x128xi1>, vector<1x8x128xf32>
    %cst_22 = arith.constant dense<0.000000e+00> : vector<1x8xf32>
    %49 = vector.multi_reduction <add>, %48, %cst_22 [2] : vector<1x8x128xf32> to vector<1x8xf32>
    %50 = vector.shape_cast %49 : vector<1x8xf32> to vector<1x8x1xf32>
    %cst_23 = arith.constant 3.125000e-02 : f32
    %51 = vector.broadcast %cst_23 : f32 to vector<1x8x1xf32>
    %52 = arith.mulf %50, %51 : vector<1x8x1xf32>
    %cst_24 = arith.constant 9.99999974E-6 : f32
    %53 = vector.broadcast %cst_24 : f32 to vector<1x8x1xf32>
    %54 = arith.addf %52, %53 : vector<1x8x1xf32>
    %55 = math.rsqrt %54 : vector<1x8x1xf32>
    %56 = vector.broadcast %55 : vector<1x8x1xf32> to vector<1x8x128xf32>
    %57 = arith.mulf %40, %56 : vector<1x8x128xf32>
    %c0_25 = arith.constant 0 : index
    %c0_26 = arith.constant 0 : index
    %58 = vector.load %arg6[%c0_25, %c0_26] : memref<1x128xf32, #tpu.memory_space<vmem>>, vector<1x128xf32>
    %59 = vector.shape_cast %58 : vector<1x128xf32> to vector<1x1x128xf32>
    %60 = vector.broadcast %59 : vector<1x1x128xf32> to vector<1x8x128xf32>
    %61 = arith.mulf %57, %60 : vector<1x8x128xf32>
    %c0_27 = arith.constant 0 : index
    %c0_28 = arith.constant 0 : index
    %62 = vector.load %arg7[%c0_27, %c0_28] : memref<1x128xf32, #tpu.memory_space<vmem>>, vector<1x128xf32>
    %63 = vector.shape_cast %62 : vector<1x128xf32> to vector<1x1x128xf32>
    %64 = vector.broadcast %63 : vector<1x1x128xf32> to vector<1x8x128xf32>
    %65 = arith.addf %61, %64 : vector<1x8x128xf32>
    %c0_29 = arith.constant 0 : index
    %c0_30 = arith.constant 0 : index
    %c0_31 = arith.constant 0 : index
    %66 = vector.load %arg8[%c0_29, %c0_30, %c0_31] : memref<1x8x128xf32, #tpu.memory_space<vmem>>, vector<1x8x128xf32>
    tpu.vector_store %arg8[%c0_29, %c0_30, %c0_31], %65 {strides = array<i32>} : memref<1x8x128xf32, #tpu.memory_space<vmem>>, vector<1x8x128xf32>,
    return
  }
  func.func @transform_0(%arg0: i32) -> (i32, i32, i32) {
    %c0_i32 = arith.constant 0 : i32
    %c0_i32_0 = arith.constant 0 : i32
    %c0_i32_1 = arith.constant 0 : i32
    return %arg0, %c0_i32, %c0_i32_0 : i32, i32, i32
  }
  func.func @transform_1(%arg0: i32) -> (i32, i32) {
    %c0_i32 = arith.constant 0 : i32
    %c0_i32_0 = arith.constant 0 : i32
    %c0_i32_1 = arith.constant 0 : i32
    return %c0_i32, %c0_i32_0 : i32, i32
  }
  func.func @transform_2(%arg0: i32) -> (i32, i32) {
    %c0_i32 = arith.constant 0 : i32
    %c0_i32_0 = arith.constant 0 : i32
    %c0_i32_1 = arith.constant 0 : i32
    return %c0_i32, %c0_i32_0 : i32, i32
  }
  func.func @transform_3(%arg0: i32) -> (i32, i32) {
    %c0_i32 = arith.constant 0 : i32
    %c0_i32_0 = arith.constant 0 : i32
    %c0_i32_1 = arith.constant 0 : i32
    return %c0_i32, %c0_i32_0 : i32, i32
  }
  func.func @transform_4(%arg0: i32) -> (i32, i32) {
    %c0_i32 = arith.constant 0 : i32
    %c0_i32_0 = arith.constant 0 : i32
    %c0_i32_1 = arith.constant 0 : i32
    return %c0_i32, %c0_i32_0 : i32, i32
  }
  func.func @transform_5(%arg0: i32) -> (i32, i32) {
    %c0_i32 = arith.constant 0 : i32
    %c0_i32_0 = arith.constant 0 : i32
    %c0_i32_1 = arith.constant 0 : i32
    return %c0_i32, %c0_i32_0 : i32, i32
  }
  func.func @transform_6(%arg0: i32) -> (i32, i32) {
    %c0_i32 = arith.constant 0 : i32
    %c0_i32_0 = arith.constant 0 : i32
    %c0_i32_1 = arith.constant 0 : i32
    return %c0_i32, %c0_i32_0 : i32, i32
  }
  func.func @transform_7(%arg0: i32) -> (i32, i32, i32) {
    %c0_i32 = arith.constant 0 : i32
    %c0_i32_0 = arith.constant 0 : i32
    %c0_i32_1 = arith.constant 0 : i32
    return %arg0, %c0_i32, %c0_i32_0 : i32, i32, i32
  }
}

</mosaic_0001>

<llo_original>
// kernel: tpu_custom_call.1
$region0: #{tpu_custom_call.1}
  #allocation0 [shape = 'u32[]', space=smem, size = 0x4, offset = 0x4, fixed_abs, tag = 'smem constant byte address 0x4 - core index']
  #allocation1 [shape = 'u32[72,128]{1,0:T(1,128)}', space=vmem, size = 0x9000, scoped, tag = 'internal scratch']
  %s0 = inlined_call_operand.hbm [shape: f32[2,8,128], index: 0, kind: input, shape index: {}]
  %s1 = inlined_call_operand.vmem [shape: f32[128,128], index: 1, kind: input, shape index: {}]
  %s2 = inlined_call_operand.vmem [shape: f32[128,2], index: 2, kind: input, shape index: {}]
  %s3 = inlined_call_operand.vmem [shape: f32[2,128], index: 3, kind: input, shape index: {}]
  %s4 = inlined_call_operand.hbm [shape: f32[128,128], index: 4, kind: input, shape index: {}]
  %s5 = inlined_call_operand.vmem [shape: f32[1,128], index: 5, kind: input, shape index: {}]
  %s6 = inlined_call_operand.vmem [shape: f32[1,128], index: 6, kind: input, shape index: {}]
  %s7 = inlined_call_operand.hbm [shape: f32[2,8,128], index: 7, kind: output, shape index: {}]
  %s8 = sld [smem:[#allocation0]]
  $region69: #{tpu_custom_call.1} parent=0
    _
  %s10 = ssub.s32 1, %s8
  %s11 = scalar_select 0, %s10, %s8
  $region1: #{tpu_custom_call.1} parent=0
    #allocation2 [shape = 'u8[8192]{0}', space=vmem, size = 0x2000, scoped, tag = 'input window, operand 0']
    #allocation3 [shape = 's32[2]{0}', space=sflag, size = 0x8, scoped, tag = 'scoped memory for tpu_custom_call.1']
    #allocation4 [shape = 's32[2]{0}', space=sflag, size = 0x8, scoped, tag = 'scoped memory for tpu_custom_call.1']
    #allocation5 [shape = 'u8[65536]{0}', space=vmem, size = 0x10000, scoped, tag = 'input window, operand 4, single buffered']
    #allocation6 [shape = 's32[1]{0}', space=sflag, size = 0x4, scoped, tag = 'scoped memory for tpu_custom_call.1']
    #allocation7 [shape = 'u8[8192]{0}', space=vmem, size = 0x2000, scoped, tag = 'output window, operand 0']
    %12 = vsyncpa [#allocation3], 0
    %s13 = scalar_lea.sflag [#allocation3], 1
    %14 = vsyncpa %s13, 0
    %15 = vsyncpa [#allocation6], 0
    %16 = vsyncpa [#allocation4], 0
    %s17 = scalar_lea.sflag [#allocation4], 1
    %18 = vsyncpa %s17, 0
    loop: start=0, step=1, limit=4
    $region2: #{tpu_custom_call.1} parent=1 // loop_pre_header
      _
    $region3: #{tpu_custom_call.1} parent=1 // loop_header
      %s20 = sphi 0, %s24
      %p21 = scmp.ge.s32.totalorder %s20, 4
      %s30 = sphi 0, %s32
      %s33 = sphi 0, %s30
      %s34 = sphi 0, %s33
      %s50 = sphi 0, %s34
      %s54 = sphi 0, %s54
      %s56 = sphi 0, %s54
      %s57 = sphi 0, %s56
      %s71 = sphi 0, %s57
      %s75 = sphi 0, %s75
      %s77 = sphi 0, %s75
      %s78 = sphi 0, %s77
      %s92 = sphi 0, %s78
      %s96 = sphi 0, %s96
      %s98 = sphi 0, %s96
      %s99 = sphi 0, %s98
      %s113 = sphi 0, %s99
      %s117 = sphi 0, %s117
      %s119 = sphi 0, %s117
      %s120 = sphi 0, %s119
      %s134 = sphi 0, %s120
      %s138 = sphi 0, %s138
      %s140 = sphi 0, %s138
      %s141 = sphi 0, %s140
      %s155 = sphi 0, %s141
      %s159 = sphi 0, %s159
      %s161 = sphi 0, %s159
      %s162 = sphi 0, %s161
      %s176 = sphi 0, %s162
      %s182 = sphi 0, %s184
      %s185 = sphi 0, %s182
      %s186 = sphi 0, %s185
      %s202 = sphi 0, %s186
    $region4: #{tpu_custom_call.1} parent=1 // loop_header_branch
      %23 = sbr.rel (%p21) target = $region8
    $region5: #{tpu_custom_call.1} parent=1 // loop_body
      %s25 = ssub.s32 %s20, 1
      %s26 = ssub.s32 %s20, 2
      %s27 = sadd.s32 %s20, 1
      %s28 = ssub.s32 %s20, %s27
      %p29 = scmp.eq.s32.totalorder %s28, 0
      %s31 = sadd.s32 %s30, 1
      %s32 = scalar_select %p29, %s30, %s31
      %p35 = pneg %p29
      %p36 = scmp.eq.s32.totalorder %s20, 1
      %p37 = por %p35, %p36
      %p38 = scmp.ne.s32.totalorder %s30, %s33
      %p39 = scmp.eq.s32.totalorder %s20, 0
      %p40 = por %p38, %p39
      %p41 = scmp.ne.s32.totalorder %s30, %s33
      %p42 = scmp.eq.s32.totalorder %s25, 1
      %p43 = por %p41, %p42
      %p44 = scmp.ne.s32.totalorder %s33, %s34
      %p45 = scmp.eq.s32.totalorder %s25, 0
      %p46 = por %p44, %p45
      %p47 = scmp.ne.s32.totalorder %s33, %s34
      %p48 = scmp.eq.s32.totalorder %s26, 1
      %p49 = por %p47, %p48
      %p51 = scmp.ne.s32.totalorder %s34, %s50
      %p52 = scmp.eq.s32.totalorder %s26, 0
      %p53 = por %p51, %p52
      %s55 = sadd.s32 %s54, 1
      %p58 = scmp.eq.s32.totalorder %s20, 1
      %p59 = scmp.ne.s32.totalorder %s54, %s56
      %p60 = scmp.eq.s32.totalorder %s20, 0
      %p61 = por %p59, %p60
      %p62 = scmp.ne.s32.totalorder %s54, %s56
      %p63 = scmp.eq.s32.totalorder %s25, 1
      %p64 = por %p62, %p63
      %p65 = scmp.ne.s32.totalorder %s56, %s57
      %p66 = scmp.eq.s32.totalorder %s25, 0
      %p67 = por %p65, %p66
      %p68 = scmp.ne.s32.totalorder %s56, %s57
      %p69 = scmp.eq.s32.totalorder %s26, 1
      %p70 = por %p68, %p69
      %p72 = scmp.ne.s32.totalorder %s57, %s71
      %p73 = scmp.eq.s32.totalorder %s26, 0
      %p74 = por %p72, %p73
      %s76 = sadd.s32 %s75, 1
      %p79 = scmp.eq.s32.totalorder %s20, 1
      %p80 = scmp.ne.s32.totalorder %s75, %s77
      %p81 = scmp.eq.s32.totalorder %s20, 0
      %p82 = por %p80, %p81
      %p83 = scmp.ne.s32.totalorder %s75, %s77
      %p84 = scmp.eq.s32.totalorder %s25, 1
      %p85 = por %p83, %p84
      %p86 = scmp.ne.s32.totalorder %s77, %s78
      %p87 = scmp.eq.s32.totalorder %s25, 0
      %p88 = por %p86, %p87
      %p89 = scmp.ne.s32.totalorder %s77, %s78
      %p90 = scmp.eq.s32.totalorder %s26, 1
      %p91 = por %p89, %p90
      %p93 = scmp.ne.s32.totalorder %s78, %s92
      %p94 = scmp.eq.s32.totalorder %s26, 0
      %p95 = por %p93, %p94
      %s97 = sadd.s32 %s96, 1
      %p100 = scmp.eq.s32.totalorder %s20, 1
      %p101 = scmp.ne.s32.totalorder %s96, %s98
      %p102 = scmp.eq.s32.totalorder %s20, 0
      %p103 = por %p101, %p102
      %p104 = scmp.ne.s32.totalorder %s96, %s98
      %p105 = scmp.eq.s32.totalorder %s25, 1
      %p106 = por %p104, %p105
      %p107 = scmp.ne.s32.totalorder %s98, %s99
      %p108 = scmp.eq.s32.totalorder %s25, 0
      %p109 = por %p107, %p108
      %p110 = scmp.ne.s32.totalorder %s98, %s99
      %p111 = scmp.eq.s32.totalorder %s26, 1
      %p112 = por %p110, %p111
      %p114 = scmp.ne.s32.totalorder %s99, %s113
      %p115 = scmp.eq.s32.totalorder %s26, 0
      %p116 = por %p114, %p115
      %s118 = sadd.s32 %s117, 1
      %p121 = scmp.eq.s32.totalorder %s20, 1
      %p122 = scmp.ne.s32.totalorder %s117, %s119
      %p123 = scmp.eq.s32.totalorder %s20, 0
      %p124 = por %p122, %p123
      %p125 = scmp.ne.s32.totalorder %s117, %s119
      %p126 = scmp.eq.s32.totalorder %s25, 1
      %p127 = por %p125, %p126
      %p128 = scmp.ne.s32.totalorder %s119, %s120
      %p129 = scmp.eq.s32.totalorder %s25, 0
      %p130 = por %p128, %p129
      %p131 = scmp.ne.s32.totalorder %s119, %s120
      %p132 = scmp.eq.s32.totalorder %s26, 1
      %p133 = por %p131, %p132
      %p135 = scmp.ne.s32.totalorder %s120, %s134
      %p136 = scmp.eq.s32.totalorder %s26, 0
      %p137 = por %p135, %p136
      %s139 = sadd.s32 %s138, 1
      %p142 = scmp.eq.s32.totalorder %s20, 1
      %p143 = scmp.ne.s32.totalorder %s138, %s140
      %p144 = scmp.eq.s32.totalorder %s20, 0
      %p145 = por %p143, %p144
      %p146 = scmp.ne.s32.totalorder %s138, %s140
      %p147 = scmp.eq.s32.totalorder %s25, 1
      %p148 = por %p146, %p147
      %p149 = scmp.ne.s32.totalorder %s140, %s141
      %p150 = scmp.eq.s32.totalorder %s25, 0
      %p151 = por %p149, %p150
      %p152 = scmp.ne.s32.totalorder %s140, %s141
      %p153 = scmp.eq.s32.totalorder %s26, 1
      %p154 = por %p152, %p153
      %p156 = scmp.ne.s32.totalorder %s141, %s155
      %p157 = scmp.eq.s32.totalorder %s26, 0
      %p158 = por %p156, %p157
      %s160 = sadd.s32 %s159, 1
      %p163 = scmp.eq.s32.totalorder %s20, 1
      %p164 = scmp.ne.s32.totalorder %s159, %s161
      %p165 = scmp.eq.s32.totalorder %s20, 0
      %p166 = por %p164, %p165
      %p167 = scmp.ne.s32.totalorder %s159, %s161
      %p168 = scmp.eq.s32.totalorder %s25, 1
      %p169 = por %p167, %p168
      %p170 = scmp.ne.s32.totalorder %s161, %s162
      %p171 = scmp.eq.s32.totalorder %s25, 0
      %p172 = por %p170, %p171
      %p173 = scmp.ne.s32.totalorder %s161, %s162
      %p174 = scmp.eq.s32.totalorder %s26, 1
      %p175 = por %p173, %p174
      %p177 = scmp.ne.s32.totalorder %s162, %s176
      %p178 = scmp.eq.s32.totalorder %s26, 0
      %p179 = por %p177, %p178
      %s180 = ssub.s32 %s20, %s27
      %p181 = scmp.eq.s32.totalorder %s180, 0
      %s183 = sadd.s32 %s182, 1
      %s184 = scalar_select %p181, %s182, %s183
      %p187 = pneg %p181
      %p188 = scmp.eq.s32.totalorder %s20, 1
      %p189 = por %p187, %p188
      %p190 = scmp.ne.s32.totalorder %s182, %s185
      %p191 = scmp.eq.s32.totalorder %s20, 0
      %p192 = por %p190, %p191
      %p193 = scmp.ne.s32.totalorder %s182, %s185
      %p194 = scmp.eq.s32.totalorder %s25, 1
      %p195 = por %p193, %p194
      %p196 = scmp.ne.s32.totalorder %s185, %s186
      %p197 = scmp.eq.s32.totalorder %s25, 0
      %p198 = por %p196, %p197
      %p199 = scmp.ne.s32.totalorder %s185, %s186
      %p200 = scmp.eq.s32.totalorder %s26, 1
      %p201 = por %p199, %p200
      %p203 = scmp.ne.s32.totalorder %s186, %s202
      %p204 = scmp.eq.s32.totalorder %s26, 0
      %p205 = por %p203, %p204
      %p206 = scmp.le.s32.totalorder 1, %s20
      %p207 = scmp.lt.s32.totalorder %s20, 3
      %p208 = pnand %p206, %p207
      %p209 = pneg %p208
      // Predicated region
      $region9: #{tpu_custom_call.1} parent=5 // pred_check
        _
      $region10: #{tpu_custom_call.1} parent=5 // pred_check_branch
        %211 = sbr.rel (%p208) target = $region12
      $region11: #{tpu_custom_call.1} parent=5 // pred_region
        %s212 = ssub.s32 %s20, 1
        // Predicated region
        $region13: #{tpu_custom_call.1} parent=11 // pred_check
          %p213 = pneg %p67
        $region14: #{tpu_custom_call.1} parent=11 // pred_check_branch
          %215 = sbr.rel (%p213) target = $region16
        $region15: #{tpu_custom_call.1} parent=11 // pred_region
          _
        $region16: #{tpu_custom_call.1} parent=11 // pred_fallthru
          _
        // Predicated region
        $region17: #{tpu_custom_call.1} parent=11 // pred_check
          %p216 = pneg %p88
        $region18: #{tpu_custom_call.1} parent=11 // pred_check_branch
          %218 = sbr.rel (%p216) target = $region20
        $region19: #{tpu_custom_call.1} parent=11 // pred_region
          _
        $region20: #{tpu_custom_call.1} parent=11 // pred_fallthru
          _
        // Predicated region
        $region21: #{tpu_custom_call.1} parent=11 // pred_check
          %p219 = pneg %p109
        $region22: #{tpu_custom_call.1} parent=11 // pred_check_branch
          %221 = sbr.rel (%p219) target = $region24
        $region23: #{tpu_custom_call.1} parent=11 // pred_region
          _
        $region24: #{tpu_custom_call.1} parent=11 // pred_fallthru
          _
        // Predicated region
        $region25: #{tpu_custom_call.1} parent=11 // pred_check
          %p222 = pneg %p130
        $region26: #{tpu_custom_call.1} parent=11 // pred_check_branch
          %224 = sbr.rel (%p222) target = $region28
        $region27: #{tpu_custom_call.1} parent=11 // pred_region
          %226 = vsyncadd [#allocation6], 0
          %s227 = sshll.u32 %s4, 4
          %s228 = int_to_ptr.hbm [resolvable:$true] %s227
          %s229 = sshll.u32 [#allocation5], 4
          %s230 = int_to_ptr.vmem [resolvable:$true] %s229
          %235 = dma.hbm_to_vmem [thread:$0]  %s228, 2048, %s230, [#allocation6], 128, 128, 8
        $region28: #{tpu_custom_call.1} parent=11 // pred_fallthru
          _
        // Predicated region
        $region29: #{tpu_custom_call.1} parent=11 // pred_check
          %p236 = pneg %p151
        $region30: #{tpu_custom_call.1} parent=11 // pred_check_branch
          %238 = sbr.rel (%p236) target = $region32
        $region31: #{tpu_custom_call.1} parent=11 // pred_region
          _
        $region32: #{tpu_custom_call.1} parent=11 // pred_fallthru
          _
        // Predicated region
        $region33: #{tpu_custom_call.1} parent=11 // pred_check
          %p239 = pneg %p172
        $region34: #{tpu_custom_call.1} parent=11 // pred_check_branch
          %241 = sbr.rel (%p239) target = $region36
        $region35: #{tpu_custom_call.1} parent=11 // pred_region
          _
        $region36: #{tpu_custom_call.1} parent=11 // pred_fallthru
          _
      $region12: #{tpu_custom_call.1} parent=5 // pred_fallthru
        _
      %p242 = scmp.lt.s32.totalorder %s20, 2
      // Predicated region
      $region37: #{tpu_custom_call.1} parent=5 // pred_check
        %p243 = pneg %p242
      $region38: #{tpu_custom_call.1} parent=5 // pred_check_branch
        %245 = sbr.rel (%p243) target = $region40
      $region39: #{tpu_custom_call.1} parent=5 // pred_region
        // Predicated region
        $region41: #{tpu_custom_call.1} parent=39 // pred_check
          %p246 = pneg %p40
        $region42: #{tpu_custom_call.1} parent=39 // pred_check_branch
          %248 = sbr.rel (%p246) target = $region44
        $region43: #{tpu_custom_call.1} parent=39 // pred_region
          %s249 = sand.u32 %s30, 1
          %s250 = scalar_lea.sflag [#allocation3], %s249
          %s251 = sand.u32 %s30, 1
          %s252 = smul.addr %s251, 8
          %s253 = scalar_lea.vmem [#allocation2], %s252
          %255 = vsyncadd %s250, 0
          %s256 = smul.addr %s20, 8
          %s257 = scalar_lea.hbm %s0, %s256
          %s259 = sshll.u32 %s257, 4
          %s260 = int_to_ptr.hbm [resolvable:$true] %s259
          %s261 = sshll.u32 %s253, 4
          %s262 = int_to_ptr.vmem [resolvable:$true] %s261
          %264 = dma.hbm_to_vmem [thread:$0]  %s260, 128, %s262, %s250
        $region44: #{tpu_custom_call.1} parent=39 // pred_fallthru
          _
      $region40: #{tpu_custom_call.1} parent=5 // pred_fallthru
        _
      %p265 = scmp.le.s32.totalorder 1, %s20
      %p266 = scmp.lt.s32.totalorder %s20, 3
      %p267 = pnand %p265, %p266
      %p268 = pneg %p267
      // Predicated region
      $region45: #{tpu_custom_call.1} parent=5 // pred_check
        _
      $region46: #{tpu_custom_call.1} parent=5 // pred_check_branch
        %270 = sbr.rel (%p267) target = $region48
      $region47: #{tpu_custom_call.1} parent=5 // pred_region
        %s271 = ssub.s32 %s20, 1
        %s272 = sand.u32 %s33, 1
        %s273 = scalar_lea.sflag [#allocation3], %s272
        %s274 = sand.u32 %s33, 1
        %s275 = smul.addr %s274, 8
        %s276 = scalar_lea.vmem [#allocation2], %s275
        // Predicated region
        $region49: #{tpu_custom_call.1} parent=47 // pred_check
          %p277 = pneg %p46
        $region50: #{tpu_custom_call.1} parent=47 // pred_check_branch
          %279 = sbr.rel (%p277) target = $region52
        $region51: #{tpu_custom_call.1} parent=47 // pred_region
          %281 = dma.done %s273, 128
        $region52: #{tpu_custom_call.1} parent=47 // pred_fallthru
          _
        // Predicated region
        $region53: #{tpu_custom_call.1} parent=47 // pred_check
          %p282 = pneg %p130
        $region54: #{tpu_custom_call.1} parent=47 // pred_check_branch
          %284 = sbr.rel (%p282) target = $region56
        $region55: #{tpu_custom_call.1} parent=47 // pred_region
          %286 = dma.done [#allocation6], 2048
        $region56: #{tpu_custom_call.1} parent=47 // pred_fallthru
          _
        %s287 = sand.u32 %s33, 1
        %s288 = scalar_lea.sflag [#allocation3], %s287
        %s289 = sand.u32 %s33, 1
        %s290 = smul.addr %s289, 8
        %s291 = scalar_lea.vmem [#allocation2], %s290
        %p292 = pneg %p46
        %p293 = pneg %p43
        %p294 = pneg %p67
        %p295 = pneg %p64
        %p296 = pneg %p88
        %p297 = pneg %p85
        %p298 = pneg %p109
        %p299 = pneg %p106
        %p300 = pneg %p130
        %p301 = pneg %p127
        %p302 = pneg %p151
        %p303 = pneg %p148
        %p304 = pneg %p172
        %p305 = pneg %p169
        %p306 = pneg %p198
        %p307 = pneg %p195
        %s308 = sand.u32 %s185, 1
        %s309 = scalar_lea.sflag [#allocation4], %s308
        %s310 = sand.u32 %s185, 1
        %s311 = smul.addr %s310, 8
        %s312 = scalar_lea.vmem [#allocation7], %s311
        %v313 = vld [vmem:[%s276] sm:$0xff]
        %v314 = vld [vmem:[%s1] sm:$0xff]
        %v315 = vld [vmem:[%s1 + $0x8] sm:$0xff]
        %v316 = vld [vmem:[%s1 + $0x10] sm:$0xff]
        %v317 = vld [vmem:[%s1 + $0x18] sm:$0xff]
        %v318 = vld [vmem:[%s1 + $0x20] sm:$0xff]
        %v319 = vld [vmem:[%s1 + $0x28] sm:$0xff]
        %v320 = vld [vmem:[%s1 + $0x30] sm:$0xff]
        %v321 = vld [vmem:[%s1 + $0x38] sm:$0xff]
        %v322 = vld [vmem:[%s1 + $0x40] sm:$0xff]
        %v323 = vld [vmem:[%s1 + $0x48] sm:$0xff]
        %v324 = vld [vmem:[%s1 + $0x50] sm:$0xff]
        %v325 = vld [vmem:[%s1 + $0x58] sm:$0xff]
        %v326 = vld [vmem:[%s1 + $0x60] sm:$0xff]
        %v327 = vld [vmem:[%s1 + $0x68] sm:$0xff]
        %v328 = vld [vmem:[%s1 + $0x70] sm:$0xff]
        %v329 = vld [vmem:[%s1 + $0x78] sm:$0xff]
        %330 = vmatpush.msra.mxu0 %v329
        %331 = vmatpush.msra.mxu0 %v328
        %332 = vmatpush.msra.mxu0 %v327
        %333 = vmatpush.msra.mxu0 %v326
        %334 = vmatpush.msra.mxu0 %v325
        %335 = vmatpush.msra.mxu0 %v324
        %336 = vmatpush.msra.mxu0 %v323
        %337 = vmatpush.msra.mxu0 %v322
        %338 = vmatpush.msra.mxu0 %v321
        %339 = vmatpush.msra.mxu0 %v320
        %340 = vmatpush.msra.mxu0 %v319
        %341 = vmatpush.msra.mxu0 %v318
        %342 = vmatpush.msra.mxu0 %v317
        %343 = vmatpush.msra.mxu0 %v316
        %344 = vmatpush.msra.mxu0 %v315
        %345 = vmatpush.msra.mxu0 %v314
        %346 = vmatmul.f32.gmra.mxu0 %v313
        %v347 = vpop.f32.mrf.mxu0
        %v348 = vadd.f32 0.0, %v347
        %349 = vdwg.mxu0
        %vm350 = vcmp.gt.f32.partialorder %v348, 0.0
        %v351 = vmul.f32 %v348, 0.01
        %v352 = vsel %vm350, %v348, %v351
        %v353 = vld [vmem:[%s2] sm:$0xff]
        %v354 = vld [vmem:[%s2 + $0x8] sm:$0xff]
        %v355 = vld [vmem:[%s2 + $0x10] sm:$0xff]
        %v356 = vld [vmem:[%s2 + $0x18] sm:$0xff]
        %v357 = vld [vmem:[%s2 + $0x20] sm:$0xff]
        %v358 = vld [vmem:[%s2 + $0x28] sm:$0xff]
        %v359 = vld [vmem:[%s2 + $0x30] sm:$0xff]
        %v360 = vld [vmem:[%s2 + $0x38] sm:$0xff]
        %v361 = vld [vmem:[%s2 + $0x40] sm:$0xff]
        %v362 = vld [vmem:[%s2 + $0x48] sm:$0xff]
        %v363 = vld [vmem:[%s2 + $0x50] sm:$0xff]
        %v364 = vld [vmem:[%s2 + $0x58] sm:$0xff]
        %v365 = vld [vmem:[%s2 + $0x60] sm:$0xff]
        %v366 = vld [vmem:[%s2 + $0x68] sm:$0xff]
        %v367 = vld [vmem:[%s2 + $0x70] sm:$0xff]
        %v368 = vld [vmem:[%s2 + $0x78] sm:$0xff]
        %369 = vmatpush.msra.mxu0 %v368
        %370 = vmatpush.msra.mxu0 %v367
        %371 = vmatpush.msra.mxu0 %v366
        %372 = vmatpush.msra.mxu0 %v365
        %373 = vmatpush.msra.mxu0 %v364
        %374 = vmatpush.msra.mxu0 %v363
        %375 = vmatpush.msra.mxu0 %v362
        %376 = vmatpush.msra.mxu0 %v361
        %377 = vmatpush.msra.mxu0 %v360
        %378 = vmatpush.msra.mxu0 %v359
        %379 = vmatpush.msra.mxu0 %v358
        %380 = vmatpush.msra.mxu0 %v357
        %381 = vmatpush.msra.mxu0 %v356
        %382 = vmatpush.msra.mxu0 %v355
        %383 = vmatpush.msra.mxu0 %v354
        %384 = vmatpush.msra.mxu0 %v353
        %385 = vmatmul.f32.gmra.mxu0 %v352
        %v386 = vpop.f32.mrf.mxu0
        %v387 = vadd.f32 0.0, %v386
        %388 = vdwg.mxu0
        %vm389 = vcmask 15360
        %v390 = vsel %vm389, %v387, -inf
        %v391 = vrot.slane %v390, 4
        %v392 = vmax.f32 %v390, %v391
        %v393 = vrot.slane %v392, 2
        %v394 = vmax.f32 %v392, %v393
        %v395 = vrot.slane %v394, 1
        %v396 = vmax.f32 %v394, %v395
        %v397 = vsub.f32 %v387, %v396
        %v398 = vmul.f32 %v397, 1.442695
        %v399 = vpow.pop %v398
        %v400 = vsel %vm389, %v399, 0.0
        %v401 = vrot.slane %v400, 4
        %v402 = vadd.f32 %v400, %v401
        %v403 = vrot.slane %v402, 2
        %v404 = vadd.f32 %v402, %v403
        %v405 = vrot.slane %v404, 1
        %v406 = vadd.f32 %v404, %v405
        %v407 = vrcp.pop %v406
        %v408 = vmul.f32 %v406, %v407
        %v409 = vsub.f32 1.0, %v408
        %v410 = vmul.f32 %v407, %v409
        %v411 = vadd.f32 %v407, %v410
        %vm412 = vweird.f32 %v406
        %vm413 = vweird.f32 %v407
        %vm414 = vmor %vm412, %vm413
        %v415 = vsel %vm414, %v407, %v411
        %v416 = vand.u32 2147483647, %v406
        %vm417 = vcmp.eq.f32.partialorder %v416, 8.507059e+37
        %v418 = vand.u32 %v406, 2147483648
        %v419 = vor.u32 1.1754944e-38, %v418
        %v420 = vsel %vm417, %v419, %v415
        %v421 = vmul.f32 %v399, %v420
        %v422 = vld [vmem:[%s3] sm:$0x3]
        %v424 = vsel %vm389, %v421, 0
        %vm426 = vcmask 1041408
        %v428 = vsel %vm426, %v422, 0
        %430 = vmatpush.msra.mxu0 0.0
        %431 = vmatpush.msra.mxu0 0.0
        %432 = vmatpush.msra.mxu0 0.0
        %433 = vmatpush.msra.mxu0 0.0
        %434 = vmatpush.msra.mxu0 0.0
        %435 = vmatpush.msra.mxu0 0.0
        %436 = vmatpush.msra.mxu0 0.0
        %437 = vmatpush.msra.mxu0 0.0
        %438 = vmatpush.msra.mxu0 0.0
        %439 = vmatpush.msra.mxu0 0.0
        %440 = vmatpush.msra.mxu0 0.0
        %441 = vmatpush.msra.mxu0 0.0
        %442 = vmatpush.msra.mxu0 0.0
        %443 = vmatpush.msra.mxu0 0.0
        %444 = vmatpush.msra.mxu0 0.0
        %445 = vmatpush.msra.mxu0 %v428
        %446 = vmatmul.f32.gmra.mxu0 %v424
        %v447 = vpop.f32.mrf.mxu0
        %v448 = vadd.f32 0.0, %v447
        %449 = vdwg.mxu0
        %v450 = vmul.f32 %v448, %v348
        %v451 = vrot.slane %v450, 4
        %v452 = vadd.f32 %v450, %v451
        %v453 = vrot.slane %v452, 2
        %v454 = vadd.f32 %v452, %v453
        %v455 = vrot.slane %v454, 1
        %v456 = vadd.f32 %v454, %v455
        %v457 = vld [vmem:[#allocation5] sm:$0xff]
        %v458 = vld [vmem:[#allocation5 + $0x8] sm:$0xff]
        %v459 = vld [vmem:[#allocation5 + $0x10] sm:$0xff]
        %v460 = vld [vmem:[#allocation5 + $0x18] sm:$0xff]
        %v461 = vld [vmem:[#allocation5 + $0x20] sm:$0xff]
        %v462 = vld [vmem:[#allocation5 + $0x28] sm:$0xff]
        %v463 = vld [vmem:[#allocation5 + $0x30] sm:$0xff]
        %v464 = vld [vmem:[#allocation5 + $0x38] sm:$0xff]
        %v465 = vld [vmem:[#allocation5 + $0x40] sm:$0xff]
        %v466 = vld [vmem:[#allocation5 + $0x48] sm:$0xff]
        %v467 = vld [vmem:[#allocation5 + $0x50] sm:$0xff]
        %v468 = vld [vmem:[#allocation5 + $0x58] sm:$0xff]
        %v469 = vld [vmem:[#allocation5 + $0x60] sm:$0xff]
        %v470 = vld [vmem:[#allocation5 + $0x68] sm:$0xff]
        %v471 = vld [vmem:[#allocation5 + $0x70] sm:$0xff]
        %v472 = vld [vmem:[#allocation5 + $0x78] sm:$0xff]
        %473 = vmatpush.msra.mxu0 %v472
        %474 = vmatpush.msra.mxu0 %v471
        %475 = vmatpush.msra.mxu0 %v470
        %476 = vmatpush.msra.mxu0 %v469
        %477 = vmatpush.msra.mxu0 %v468
        %478 = vmatpush.msra.mxu0 %v467
        %479 = vmatpush.msra.mxu0 %v466
        %480 = vmatpush.msra.mxu0 %v465
        %481 = vmatpush.msra.mxu0 %v464
        %482 = vmatpush.msra.mxu0 %v463
        %483 = vmatpush.msra.mxu0 %v462
        %484 = vmatpush.msra.mxu0 %v461
        %485 = vmatpush.msra.mxu0 %v460
        %486 = vmatpush.msra.mxu0 %v459
        %487 = vmatpush.msra.mxu0 %v458
        %488 = vmatpush.msra.mxu0 %v457
        %489 = vmatmul.f32.gmra.mxu0 %v456
        %v490 = vpop.f32.mrf.mxu0
        %v491 = vadd.f32 0.0, %v490
        %492 = vdwg.mxu0
        %v493 = vperm.slane %v491, 0
        %v494 = vadd.f32 %v313, %v493
        %495 = vadd.xlane.f32.xlu0 %v494
        %v496 = vpop.xlane.xlu0 %495
        %v497 = vmul.f32 %v496, 0.03125
        %v498 = vsub.f32 %v494, %v497
        %v499 = vlaneseq
        %v500 = vand.u32 %v499, 127
        %vm501 = vcmp.lt.s32.totalorder %v500, 32
        %v502 = vmul.f32 %v498, %v498
        %v503 = vsel %vm501, 1, 0
        %vm504 = vcmp.eq.s32.totalorder %v503, 1
        %v505 = vsel %vm504, %v502, 0.0
        %506 = vadd.xlane.f32.xlu0 %v505
        %v507 = vpop.xlane.xlu0 %506
        %v508 = vmul.f32 %v507, 0.03125
        %v509 = vadd.f32 %v508, 1e-05
        %v510 = vrsqrt.pop %v509
        %v511 = vmul.f32 %v510, %v509
        %v512 = vmul.f32 %v511, %v510
        %v513 = vmul.f32 0.5, %v512
        %v514 = vsub.f32 1.5, %v513
        %v515 = vmul.f32 %v510, %v514
        %vm516 = vweird.f32 %v509
        %vm517 = vweird.f32 %v510
        %vm518 = vmor %vm516, %vm517
        %v519 = vsel %vm518, %v510, %v515
        %v520 = vmul.f32 %v498, %v519
        %v521 = vld [vmem:[%s5] sm:$0x1]
        %v523 = vperm.slane %v521, 0
        %v525 = vmul.f32 %v520, %v523
        %v526 = vld [vmem:[%s6] sm:$0x1]
        %v528 = vperm.slane %v526, 0
        %v530 = vadd.f32 %v525, %v528
        %531 = vst [vmem:[%s312] sm:$0xff] %v530
        %s532 = sand.u32 %s185, 1
        %s533 = scalar_lea.sflag [#allocation4], %s532
        %s534 = sand.u32 %s185, 1
        %s535 = smul.addr %s534, 8
        %s536 = scalar_lea.vmem [#allocation7], %s535
        // Predicated region
        $region57: #{tpu_custom_call.1} parent=47 // pred_check
          %p537 = pneg %p195
        $region58: #{tpu_custom_call.1} parent=47 // pred_check_branch
          %539 = sbr.rel (%p537) target = $region60
        $region59: #{tpu_custom_call.1} parent=47 // pred_region
          %541 = vsyncadd %s533, 0
          %s542 = smul.addr %s25, 8
          %s543 = scalar_lea.hbm %s7, %s542
          %s545 = sshll.u32 %s536, 4
          %s546 = int_to_ptr.vmem [resolvable:$true] %s545
          %s547 = sshll.u32 %s543, 4
          %s548 = int_to_ptr.hbm [resolvable:$true] %s547
          %550 = dma.vmem_to_hbm [thread:$0]  %s546, 128, %s548, %s533
        $region60: #{tpu_custom_call.1} parent=47 // pred_fallthru
          _
      $region48: #{tpu_custom_call.1} parent=5 // pred_fallthru
        _
      %p551 = scmp.le.s32.totalorder 2, %s20
      // Predicated region
      $region61: #{tpu_custom_call.1} parent=5 // pred_check
        %p552 = pneg %p551
      $region62: #{tpu_custom_call.1} parent=5 // pred_check_branch
        %554 = sbr.rel (%p552) target = $region64
      $region63: #{tpu_custom_call.1} parent=5 // pred_region
        %s555 = ssub.s32 %s20, 2
        // Predicated region
        $region65: #{tpu_custom_call.1} parent=63 // pred_check
          %p556 = pneg %p201
        $region66: #{tpu_custom_call.1} parent=63 // pred_check_branch
          %558 = sbr.rel (%p556) target = $region68
        $region67: #{tpu_custom_call.1} parent=63 // pred_region
          %s559 = sand.u32 %s186, 1
          %s560 = scalar_lea.sflag [#allocation4], %s559
          %s561 = sand.u32 %s186, 1
          %s562 = smul.addr %s561, 8
          %s563 = scalar_lea.vmem [#allocation7], %s562
          %565 = dma.done %s560, 128
        $region68: #{tpu_custom_call.1} parent=63 // pred_fallthru
          _
      $region64: #{tpu_custom_call.1} parent=5 // pred_fallthru
        _
    $region6: #{tpu_custom_call.1} parent=1 // loop_footer
      %s24 = sadd.s32 1, %s20
    $region7: #{tpu_custom_call.1} parent=1 // loop_footer_branch
      %19 = sbr.rel target = $region3
    $region8: #{tpu_custom_call.1} parent=1 // loop_exit
      _
    %566 = vsyncpa [#allocation3], 1
    %s567 = scalar_lea.sflag [#allocation3], 1
    %568 = vsyncpa %s567, 1
    %569 = vsyncpa [#allocation6], 1
    %570 = vsyncpa [#allocation4], 1
    %s571 = scalar_lea.sflag [#allocation4], 1
    %572 = vsyncpa %s571, 1

</llo_original>
